<compile_context>
chip_gen: v7x
topology: tpu7x:2x2x1
jax: 0.10.0
libtpu: 0.0.40
codegen_flags: <defaults>
</compile_context>

<pallas_src>
import functools

import jax
import jax.numpy as jnp
from jax.experimental import pallas as pl
from jax.experimental.pallas import tpu as pltpu


def sablock_kernel(x_ref, wqkv_ref, wo_ref, bo_ref, o_ref, acc_ref, *, head_dim):
    """One (batch, head) grid step.

    x_ref   : (1, N, D)     bf16 activations (block index constant over heads,
                            so Pallas does not re-DMA it per head step)
    wqkv_ref: (1, D, 3*hd)  bf16 fused per-head q|k|v projection
                            (softmax scale pre-folded into the q columns)
    wo_ref  : (1, hd, D)    bf16 per-head slice of the output projection
    bo_ref  : (1, D)        f32 output-projection bias
    o_ref   : (1, N, D)     output block (written on the last head only)
    acc_ref : (N, D)        f32 VMEM scratch accumulating the head sum
    """
    hd = head_dim
    h = pl.program_id(1)

    x = x_ref[0]                                          # (N, D) bf16

    # Fused per-head q|k|v projection: one matmul, 3*hd-wide output, x read once.
    qkv = jnp.dot(x, wqkv_ref[0],
                  preferred_element_type=jnp.float32).astype(jnp.bfloat16)
    q = qkv[:, :hd]                                       # (N, hd) (scale folded in)
    k = qkv[:, hd:2 * hd]                                 # (N, hd)
    v = qkv[:, 2 * hd:]                                   # (N, hd)

    # Scores for this head: (N, N), f32 MXU accumulation (NT matmul).
    s = jax.lax.dot_general(q, k, (((1,), (1,)), ((), ())),
                            preferred_element_type=jnp.float32)
    s = s - jnp.max(s, axis=-1, keepdims=True)            # max-stabilized softmax
    p = jnp.exp(s)                                        # f32 (v5e-safe)
    denom = jnp.sum(p, axis=-1, keepdims=True)            # (N, 1)
    # drop_weights is identity (dropout_rate = 0.0).

    # PV with UNNORMALIZED probs; normalize afterwards on the small (N, hd)
    # result using an EUP approximate reciprocal (not an O(N^2) VALU divide).
    pv = jnp.dot(p.astype(jnp.bfloat16), v, preferred_element_type=jnp.float32)
    pv = pv * pl.reciprocal(denom, approx=True)

    # Per-head slice of the output projection: lane-dense (N, D) result; the
    # head reduction happens in the single f32 accumulator below (one live
    # (N, D) slab instead of H of them).
    contrib = jnp.dot(pv.astype(jnp.bfloat16), wo_ref[0],
                      preferred_element_type=jnp.float32)

    @pl.when(h == 0)
    def _():
        acc_ref[...] = jnp.zeros_like(acc_ref)

    acc_ref[...] += contrib

    @pl.when(h == pl.num_programs(1) - 1)
    def _():
        # drop_output is identity (dropout_rate = 0.0).
        o_ref[0] = (acc_ref[...] + bo_ref[...]).astype(o_ref.dtype)


def _vmem_limit_bytes():
    """Generation-aware scoped-VMEM limit: never request ~100% of physical
    VMEM (v7x only has 64 MiB per TensorCore); leave headroom for the
    double-buffered pipeline blocks and Mosaic-internal scratch."""
    try:
        phys = pltpu.get_tpu_info().vmem_capacity_bytes
        return int(min(phys * 3 // 4, 96 * 1024 * 1024))
    except Exception:
        return 48 * 1024 * 1024


def sablock_forward(x, w_qkv, w_out, b_out, num_heads):
    """x: (B, N, D); w_qkv: (3D, D); w_out: (D, D); b_out: (1, D)."""
    B, N, D = x.shape
    H = num_heads
    assert D % H == 0, "hidden size must be divisible by num_heads"
    hd = D // H
    scale = float(hd) ** (-0.5)
    out_dtype = x.dtype

    # ---- One-time wrapper-side weight re-layout (no in-kernel transposes,
    #      no lane-axis concatenation, scale folded into q) ----
    # qkv output features are ordered (qkv, head, d): row s*D + h*hd + d.
    wq = w_qkv[:D].reshape(H, hd, D) * scale               # q rows, pre-scaled
    wk = w_qkv[D:2 * D].reshape(H, hd, D)
    wv = w_qkv[2 * D:].reshape(H, hd, D)
    wqkv = jnp.concatenate([wq, wk, wv], axis=1)            # (H, 3*hd, D)
    wqkv = wqkv.transpose(0, 2, 1).astype(jnp.bfloat16)     # (H, D, 3*hd)
    # out_proj: y[n, e] = sum_{h,d} pv[h, n, d] * w_out[e, h*hd + d]
    wo = w_out.reshape(D, H, hd).transpose(1, 2, 0).astype(jnp.bfloat16)  # (H, hd, D)
    bo = b_out.astype(jnp.float32)
    xb = x.astype(jnp.bfloat16)                              # halve x DMA traffic

    kernel = functools.partial(sablock_kernel, head_dim=hd)

    return pl.pallas_call(
        kernel,
        out_shape=jax.ShapeDtypeStruct((B, N, D), out_dtype),
        grid_spec=pltpu.PrefetchScalarGridSpec(
            num_scalar_prefetch=0,
            grid=(B, H),                                     # heads innermost (reduction)
            in_specs=[
                pl.BlockSpec((1, N, D), lambda b, h: (b, 0, 0)),       # x
                pl.BlockSpec((1, D, 3 * hd), lambda b, h: (h, 0, 0)),  # fused qkv W
                pl.BlockSpec((1, hd, D), lambda b, h: (h, 0, 0)),      # out-proj slice
                pl.BlockSpec((1, D), lambda b, h: (0, 0)),             # out-proj bias
            ],
            out_specs=pl.BlockSpec((1, N, D), lambda b, h: (b, 0, 0)),
            scratch_shapes=[pltpu.VMEM((N, D), jnp.float32)],
        ),
        compiler_params=pltpu.CompilerParams(
            dimension_semantics=("parallel", "arbitrary"),
            vmem_limit_bytes=_vmem_limit_bytes()),
    )(xb, wqkv, wo, bo)


def sablock_reference(x, w_qkv, w_out, b_out, num_heads):
    """Pure-JAX f32 reference mirroring the PyTorch forward."""
    B, N, D = x.shape
    hd = D // num_heads
    qkv = x @ w_qkv.T                                                # (B, N, 3D)
    qkv = qkv.reshape(B, N, 3, num_heads, hd).transpose(2, 0, 3, 1, 4)
    q, k, v = qkv[0], qkv[1], qkv[2]                                 # (B, H, N, hd)
    att = jax.nn.softmax(
        jnp.einsum('bhxd,bhyd->bhxy', q, k) * (hd ** -0.5), axis=-1)
    o = jnp.einsum('bhxy,bhyd->bhxd', att, v)
    o = o.transpose(0, 2, 1, 3).reshape(B, N, D)
    return o @ w_out.T + b_out[0]


if __name__ == "__main__":
    # SABlock(hidden_size=32, num_heads=4, dropout_rate=0.0, qkv_bias=False)
    B, N, hidden, num_heads = 2, 16, 32, 4

    key = jax.random.PRNGKey(0)
    kx, kqkv, kw, kb = jax.random.split(key, 4)

    x = jax.random.normal(kx, (B, N, hidden), dtype=jnp.float32)
    # Deterministic synthetic parameters (shapes from nn.Linear in __init__).
    w_qkv = jax.random.normal(kqkv, (3 * hidden, hidden), dtype=jnp.float32) * 0.05
    w_out = jax.random.normal(kw, (hidden, hidden), dtype=jnp.float32) * 0.05
    b_out = jax.random.normal(kb, (1, hidden), dtype=jnp.float32) * 0.05

    out = sablock_forward(x, w_qkv, w_out, b_out, num_heads)
    out = jax.block_until_ready(out)

    ref = sablock_reference(x, w_qkv, w_out, b_out, num_heads)
    assert out.shape == (B, N, hidden)
    # Tolerance accounts for bf16 matmul inputs (f32 accumulation) and the
    # approximate EUP reciprocal used for the softmax denominator.
    assert jnp.allclose(out, ref, atol=2e-2, rtol=2e-2), "mismatch vs reference"

    print("KERNEL_OK")
</pallas_src>

<mosaic_0001>
module attributes {stable_mosaic.version = 11 : i64} {
  func.func @sablock_kernel(%arg0: i32, %arg1: i32, %arg2: memref<1x16x32xbf16, #tpu.memory_space<vmem>>, %arg3: memref<1x32x24xbf16, #tpu.memory_space<vmem>>, %arg4: memref<1x8x32xbf16, #tpu.memory_space<vmem>>, %arg5: memref<1x32xf32, #tpu.memory_space<vmem>>, %arg6: memref<1x16x32xf32, #tpu.memory_space<vmem>>, %arg7: memref<16x32xf32, #tpu.memory_space<vmem>>) attributes {dimension_semantics = [#tpu.dimension_semantics<parallel>, #tpu.dimension_semantics<arbitrary>], iteration_bounds = array<i64: 2, 4>, scalar_prefetch = 0 : i64, scratch_operands = 1 : i64, tpu.core_type = #tpu.core_type<tc>, window_params = [{transform_indices = @transform_0, window_bounds = array<i64: 1, 16, 32>}, {transform_indices = @transform_1, window_bounds = array<i64: 1, 32, 24>}, {transform_indices = @transform_2, window_bounds = array<i64: 1, 8, 32>}, {pipeline_mode = #tpu.pipeline_mode<synchronous>, transform_indices = @transform_3, window_bounds = array<i64: 1, 32>}, {transform_indices = @transform_4, window_bounds = array<i64: 1, 16, 32>}]} {
    %c0 = arith.constant 0 : index
    %c0_0 = arith.constant 0 : index
    %c0_1 = arith.constant 0 : index
    %0 = vector.load %arg2[%c0, %c0_0, %c0_1] : memref<1x16x32xbf16, #tpu.memory_space<vmem>>, vector<1x16x32xbf16>
    %1 = vector.shape_cast %0 : vector<1x16x32xbf16> to vector<16x32xbf16>
    %c0_2 = arith.constant 0 : index
    %c0_3 = arith.constant 0 : index
    %c0_4 = arith.constant 0 : index
    %2 = vector.load %arg3[%c0_2, %c0_3, %c0_4] : memref<1x32x24xbf16, #tpu.memory_space<vmem>>, vector<1x32x24xbf16>
    %3 = vector.shape_cast %2 : vector<1x32x24xbf16> to vector<32x24xbf16>
    %cst = arith.constant dense<0.000000e+00> : vector<16x24xf32>
    %4 = tpu.matmul %1, %3, %cst {dimension_numbers = #tpu.dot_dimension_numbers<[1], [0], [0], [1], [0, 0, 1, 1], [], []>} : vector<16x32xbf16>, vector<32x24xbf16>, vector<16x24xf32> -> vector<16x24xf32>
    %5 = arith.truncf %4 : vector<16x24xf32> to vector<16x24xbf16>
    %6 = vector.extract_strided_slice %5 {offsets = [0, 0], sizes = [16, 8], strides = [1, 1]} : vector<16x24xbf16> to vector<16x8xbf16>
    %7 = vector.extract_strided_slice %5 {offsets = [0, 8], sizes = [16, 8], strides = [1, 1]} : vector<16x24xbf16> to vector<16x8xbf16>
    %8 = vector.extract_strided_slice %5 {offsets = [0, 16], sizes = [16, 8], strides = [1, 1]} : vector<16x24xbf16> to vector<16x8xbf16>
    %cst_5 = arith.constant dense<0.000000e+00> : vector<16x16xf32>
    %9 = tpu.matmul %6, %7, %cst_5 {dimension_numbers = #tpu.dot_dimension_numbers<[1], [1], [0], [0], [0, 0, 1, 0], [], []>} : vector<16x8xbf16>, vector<16x8xbf16>, vector<16x16xf32> -> vector<16x16xf32>
    %cst_6 = arith.constant dense<0xFF800000> : vector<16xf32>
    %10 = vector.multi_reduction <maximumf>, %9, %cst_6 [1] : vector<16x16xf32> to vector<16xf32>
    %11 = vector.shape_cast %10 : vector<16xf32> to vector<16x1xf32>
    %12 = vector.broadcast %11 : vector<16x1xf32> to vector<16x16xf32>
    %13 = arith.subf %9, %12 : vector<16x16xf32>
    %14 = math.exp %13 : vector<16x16xf32>
    %cst_7 = arith.constant dense<0.000000e+00> : vector<16xf32>
    %15 = vector.multi_reduction <add>, %14, %cst_7 [1] : vector<16x16xf32> to vector<16xf32>
    %16 = vector.shape_cast %15 : vector<16xf32> to vector<16x1xf32>
    %17 = arith.truncf %14 : vector<16x16xf32> to vector<16x16xbf16>
    %cst_8 = arith.constant dense<0.000000e+00> : vector<16x8xf32>
    %18 = tpu.matmul %17, %8, %cst_8 {dimension_numbers = #tpu.dot_dimension_numbers<[1], [0], [0], [1], [0, 0, 1, 1], [], []>} : vector<16x16xbf16>, vector<16x8xbf16>, vector<16x8xf32> -> vector<16x8xf32>
    %19 = tpu.reciprocal %16 {approx = true} : vector<16x1xf32> -> vector<16x1xf32>
    %20 = vector.broadcast %19 : vector<16x1xf32> to vector<16x8xf32>
    %21 = arith.mulf %18, %20 : vector<16x8xf32>
    %22 = arith.truncf %21 : vector<16x8xf32> to vector<16x8xbf16>
    %c0_9 = arith.constant 0 : index
    %c0_10 = arith.constant 0 : index
    %c0_11 = arith.constant 0 : index
    %23 = vector.load %arg4[%c0_9, %c0_10, %c0_11] : memref<1x8x32xbf16, #tpu.memory_space<vmem>>, vector<1x8x32xbf16>
    %24 = vector.shape_cast %23 : vector<1x8x32xbf16> to vector<8x32xbf16>
    %cst_12 = arith.constant dense<0.000000e+00> : vector<16x32xf32>
    %25 = tpu.matmul %22, %24, %cst_12 {dimension_numbers = #tpu.dot_dimension_numbers<[1], [0], [0], [1], [0, 0, 1, 1], [], []>} : vector<16x8xbf16>, vector<8x32xbf16>, vector<16x32xf32> -> vector<16x32xf32>
    %c0_i32 = arith.constant 0 : i32
    %26 = arith.cmpi eq, %arg1, %c0_i32 : i32
    %27 = arith.extui %26 : i1 to i32
    %c0_i32_13 = arith.constant 0 : i32
    %28 = arith.cmpi ne, %27, %c0_i32_13 : i32
    scf.if %28 {
      %cst_19 = arith.constant 0.000000e+00 : f32
      %35 = vector.broadcast %cst_19 : f32 to vector<16x32xf32>
      %c0_20 = arith.constant 0 : index
      %c0_21 = arith.constant 0 : index
      %36 = vector.load %arg7[%c0_20, %c0_21] : memref<16x32xf32, #tpu.memory_space<vmem>>, vector<16x32xf32>
      tpu.vector_store %arg7[%c0_20, %c0_21], %35 {strides = array<i32>} : memref<16x32xf32, #tpu.memory_space<vmem>>, vector<16x32xf32>,
    } else {
    }
    %c0_14 = arith.constant 0 : index
    %c0_15 = arith.constant 0 : index
    %29 = vector.load %arg7[%c0_14, %c0_15] : memref<16x32xf32, #tpu.memory_space<vmem>>, vector<16x32xf32>
    %30 = arith.addf %29, %25 : vector<16x32xf32>
    %c0_16 = arith.constant 0 : index
    %c0_17 = arith.constant 0 : index
    %31 = vector.load %arg7[%c0_16, %c0_17] : memref<16x32xf32, #tpu.memory_space<vmem>>, vector<16x32xf32>
    tpu.vector_store %arg7[%c0_16, %c0_17], %30 {strides = array<i32>} : memref<16x32xf32, #tpu.memory_space<vmem>>, vector<16x32xf32>,
    %c3_i32 = arith.constant 3 : i32
    %32 = arith.cmpi eq, %arg1, %c3_i32 : i32
    %33 = arith.extui %32 : i1 to i32
    %c0_i32_18 = arith.constant 0 : i32
    %34 = arith.cmpi ne, %33, %c0_i32_18 : i32
    scf.if %34 {
      %c0_19 = arith.constant 0 : index
      %c0_20 = arith.constant 0 : index
      %35 = vector.load %arg7[%c0_19, %c0_20] : memref<16x32xf32, #tpu.memory_space<vmem>>, vector<16x32xf32>
      %c0_21 = arith.constant 0 : index
      %c0_22 = arith.constant 0 : index
      %36 = vector.load %arg5[%c0_21, %c0_22] : memref<1x32xf32, #tpu.memory_space<vmem>>, vector<1x32xf32>
      %37 = vector.broadcast %36 : vector<1x32xf32> to vector<16x32xf32>
      %38 = arith.addf %35, %37 : vector<16x32xf32>
      %c0_23 = arith.constant 0 : index
      %c0_24 = arith.constant 0 : index
      %c0_25 = arith.constant 0 : index
      %39 = vector.load %arg6[%c0_23, %c0_24, %c0_25] : memref<1x16x32xf32, #tpu.memory_space<vmem>>, vector<1x16x32xf32>
      %40 = vector.shape_cast %39 : vector<1x16x32xf32> to vector<16x32xf32>
      %41 = vector.shape_cast %38 : vector<16x32xf32> to vector<1x16x32xf32>
      tpu.vector_store %arg6[%c0_23, %c0_24, %c0_25], %41 {strides = array<i32>} : memref<1x16x32xf32, #tpu.memory_space<vmem>>, vector<1x16x32xf32>,
    } else {
    }
    return
  }
  func.func @transform_0(%arg0: i32, %arg1: i32) -> (i32, i32, i32) {
    %c0_i32 = arith.constant 0 : i32
    %c0_i32_0 = arith.constant 0 : i32
    %c0_i32_1 = arith.constant 0 : i32
    return %arg0, %c0_i32, %c0_i32_0 : i32, i32, i32
  }
  func.func @transform_1(%arg0: i32, %arg1: i32) -> (i32, i32, i32) {
    %c0_i32 = arith.constant 0 : i32
    %c0_i32_0 = arith.constant 0 : i32
    %c0_i32_1 = arith.constant 0 : i32
    return %arg1, %c0_i32, %c0_i32_0 : i32, i32, i32
  }
  func.func @transform_2(%arg0: i32, %arg1: i32) -> (i32, i32, i32) {
    %c0_i32 = arith.constant 0 : i32
    %c0_i32_0 = arith.constant 0 : i32
    %c0_i32_1 = arith.constant 0 : i32
    return %arg1, %c0_i32, %c0_i32_0 : i32, i32, i32
  }
  func.func @transform_3(%arg0: i32, %arg1: i32) -> (i32, i32) {
    %c0_i32 = arith.constant 0 : i32
    %c0_i32_0 = arith.constant 0 : i32
    %c0_i32_1 = arith.constant 0 : i32
    return %c0_i32, %c0_i32_0 : i32, i32
  }
  func.func @transform_4(%arg0: i32, %arg1: i32) -> (i32, i32, i32) {
    %c0_i32 = arith.constant 0 : i32
    %c0_i32_0 = arith.constant 0 : i32
    %c0_i32_1 = arith.constant 0 : i32
    return %arg0, %c0_i32, %c0_i32_0 : i32, i32, i32
  }
}

</mosaic_0001>

<llo_original>
// kernel: tpu_custom_call.1
$region0: #{tpu_custom_call.1}
  #allocation0 [shape = 'u32[]', space=smem, size = 0x4, offset = 0x4, fixed_abs, tag = 'smem constant byte address 0x4 - core index']
  #allocation1 [shape = 'u32[144,128]{1,0:T(1,128)}', space=vmem, size = 0x12000, scoped, tag = 'internal scratch']
  #allocation2 [shape = 'f32[16,32]{1,0:T(8,128)}', space=vmem, size = 0x2000, scoped, tag = 'scratch operand']
  %s0 = inlined_call_operand.vmem [shape: bf16[2,16,32], index: 0, kind: input, shape index: {}]
  %s1 = inlined_call_operand.vmem [shape: bf16[4,32,24], index: 1, kind: input, shape index: {}]
  %s2 = inlined_call_operand.vmem [shape: bf16[4,8,32], index: 2, kind: input, shape index: {}]
  %s3 = inlined_call_operand.vmem [shape: f32[1,32], index: 3, kind: input, shape index: {}]
  %s4 = inlined_call_operand.hbm [shape: f32[2,16,32], index: 4, kind: output, shape index: {}]
  %s5 = sld [smem:[#allocation0]]
  $region57: #{tpu_custom_call.1} parent=0
    _
  %s7 = ssub.s32 1, %s5
  %s8 = scalar_select 0, %s7, %s5
  $region1: #{tpu_custom_call.1} parent=0
    #allocation3 [shape = 'u8[16384]{0}', space=vmem, size = 0x4000, scoped, tag = 'output window, operand 0']
    #allocation4 [shape = 's32[2]{0}', space=sflag, size = 0x8, scoped, tag = 'scoped memory for tpu_custom_call.1']
    %9 = vsyncpa [#allocation4], 0
    %s10 = scalar_lea.sflag [#allocation4], 1
    %11 = vsyncpa %s10, 0
    loop: start=0, step=1, limit=10
    $region2: #{tpu_custom_call.1} parent=1 // loop_pre_header
      _
    $region3: #{tpu_custom_call.1} parent=1 // loop_header
      %s13 = sphi 0, %s17
      %p14 = scmp.ge.s32.totalorder %s13, 10
      %s20 = sphi 0, %s32
      %s21 = sphi 0, %s28
      %s22 = sphi 0, %s20
      %s23 = sphi 0, %s21
      %s24 = sphi 0, %s22
      %s25 = sphi 0, %s23
      %s35 = sphi 0, %s37
      %s38 = sphi 0, %s35
      %s39 = sphi 0, %s38
      %s55 = sphi 0, %s39
      %s61 = sphi 0, %s63
      %s64 = sphi 0, %s61
      %s65 = sphi 0, %s64
      %s81 = sphi 0, %s65
      %s87 = sphi 0, %s89
      %s90 = sphi 0, %s87
      %s91 = sphi 0, %s90
      %s107 = sphi 0, %s91
      %s111 = sphi 0, %s111
      %s113 = sphi 0, %s111
      %s114 = sphi 0, %s113
      %s128 = sphi 0, %s114
      %s134 = sphi 0, %s136
      %s137 = sphi 0, %s134
      %s138 = sphi 0, %s137
      %s154 = sphi 0, %s138
    $region4: #{tpu_custom_call.1} parent=1 // loop_header_branch
      %16 = sbr.rel (%p14) target = $region8
    $region5: #{tpu_custom_call.1} parent=1 // loop_body
      %s18 = ssub.s32 %s13, 1
      %s19 = ssub.s32 %s13, 2
      %s26 = sadd.s32 1, %s21
      %p27 = scmp.ge.s32.totalorder %s26, 4
      %s28 = scalar_select %p27, 0, %s26
      %s29 = sadd.s32 1, %s20
      %s30 = scalar_select %p27, %s29, %s20
      %p31 = scmp.ge.s32.totalorder %s30, 2
      %s32 = scalar_select %p31, 0, %s30
      %s33 = ssub.s32 %s20, %s32
      %p34 = scmp.eq.s32.totalorder %s33, 0
      %s36 = sadd.s32 %s35, 1
      %s37 = scalar_select %p34, %s35, %s36
      %p40 = pneg %p34
      %p41 = scmp.eq.s32.totalorder %s13, 7
      %p42 = por %p40, %p41
      %p43 = scmp.ne.s32.totalorder %s35, %s38
      %p44 = scmp.eq.s32.totalorder %s13, 0
      %p45 = por %p43, %p44
      %p46 = scmp.ne.s32.totalorder %s35, %s38
      %p47 = scmp.eq.s32.totalorder %s18, 7
      %p48 = por %p46, %p47
      %p49 = scmp.ne.s32.totalorder %s38, %s39
      %p50 = scmp.eq.s32.totalorder %s18, 0
      %p51 = por %p49, %p50
      %p52 = scmp.ne.s32.totalorder %s38, %s39
      %p53 = scmp.eq.s32.totalorder %s19, 7
      %p54 = por %p52, %p53
      %p56 = scmp.ne.s32.totalorder %s39, %s55
      %p57 = scmp.eq.s32.totalorder %s19, 0
      %p58 = por %p56, %p57
      %s59 = ssub.s32 %s21, %s28
      %p60 = scmp.eq.s32.totalorder %s59, 0
      %s62 = sadd.s32 %s61, 1
      %s63 = scalar_select %p60, %s61, %s62
      %p66 = pneg %p60
      %p67 = scmp.eq.s32.totalorder %s13, 7
      %p68 = por %p66, %p67
      %p69 = scmp.ne.s32.totalorder %s61, %s64
      %p70 = scmp.eq.s32.totalorder %s13, 0
      %p71 = por %p69, %p70
      %p72 = scmp.ne.s32.totalorder %s61, %s64
      %p73 = scmp.eq.s32.totalorder %s18, 7
      %p74 = por %p72, %p73
      %p75 = scmp.ne.s32.totalorder %s64, %s65
      %p76 = scmp.eq.s32.totalorder %s18, 0
      %p77 = por %p75, %p76
      %p78 = scmp.ne.s32.totalorder %s64, %s65
      %p79 = scmp.eq.s32.totalorder %s19, 7
      %p80 = por %p78, %p79
      %p82 = scmp.ne.s32.totalorder %s65, %s81
      %p83 = scmp.eq.s32.totalorder %s19, 0
      %p84 = por %p82, %p83
      %s85 = ssub.s32 %s21, %s28
      %p86 = scmp.eq.s32.totalorder %s85, 0
      %s88 = sadd.s32 %s87, 1
      %s89 = scalar_select %p86, %s87, %s88
      %p92 = pneg %p86
      %p93 = scmp.eq.s32.totalorder %s13, 7
      %p94 = por %p92, %p93
      %p95 = scmp.ne.s32.totalorder %s87, %s90
      %p96 = scmp.eq.s32.totalorder %s13, 0
      %p97 = por %p95, %p96
      %p98 = scmp.ne.s32.totalorder %s87, %s90
      %p99 = scmp.eq.s32.totalorder %s18, 7
      %p100 = por %p98, %p99
      %p101 = scmp.ne.s32.totalorder %s90, %s91
      %p102 = scmp.eq.s32.totalorder %s18, 0
      %p103 = por %p101, %p102
      %p104 = scmp.ne.s32.totalorder %s90, %s91
      %p105 = scmp.eq.s32.totalorder %s19, 7
      %p106 = por %p104, %p105
      %p108 = scmp.ne.s32.totalorder %s91, %s107
      %p109 = scmp.eq.s32.totalorder %s19, 0
      %p110 = por %p108, %p109
      %s112 = sadd.s32 %s111, 1
      %p115 = scmp.eq.s32.totalorder %s13, 7
      %p116 = scmp.ne.s32.totalorder %s111, %s113
      %p117 = scmp.eq.s32.totalorder %s13, 0
      %p118 = por %p116, %p117
      %p119 = scmp.ne.s32.totalorder %s111, %s113
      %p120 = scmp.eq.s32.totalorder %s18, 7
      %p121 = por %p119, %p120
      %p122 = scmp.ne.s32.totalorder %s113, %s114
      %p123 = scmp.eq.s32.totalorder %s18, 0
      %p124 = por %p122, %p123
      %p125 = scmp.ne.s32.totalorder %s113, %s114
      %p126 = scmp.eq.s32.totalorder %s19, 7
      %p127 = por %p125, %p126
      %p129 = scmp.ne.s32.totalorder %s114, %s128
      %p130 = scmp.eq.s32.totalorder %s19, 0
      %p131 = por %p129, %p130
      %s132 = ssub.s32 %s20, %s32
      %p133 = scmp.eq.s32.totalorder %s132, 0
      %s135 = sadd.s32 %s134, 1
      %s136 = scalar_select %p133, %s134, %s135
      %p139 = pneg %p133
      %p140 = scmp.eq.s32.totalorder %s13, 7
      %p141 = por %p139, %p140
      %p142 = scmp.ne.s32.totalorder %s134, %s137
      %p143 = scmp.eq.s32.totalorder %s13, 0
      %p144 = por %p142, %p143
      %p145 = scmp.ne.s32.totalorder %s134, %s137
      %p146 = scmp.eq.s32.totalorder %s18, 7
      %p147 = por %p145, %p146
      %p148 = scmp.ne.s32.totalorder %s137, %s138
      %p149 = scmp.eq.s32.totalorder %s18, 0
      %p150 = por %p148, %p149
      %p151 = scmp.ne.s32.totalorder %s137, %s138
      %p152 = scmp.eq.s32.totalorder %s19, 7
      %p153 = por %p151, %p152
      %p155 = scmp.ne.s32.totalorder %s138, %s154
      %p156 = scmp.eq.s32.totalorder %s19, 0
      %p157 = por %p155, %p156
      %p158 = scmp.le.s32.totalorder 1, %s13
      %p159 = scmp.lt.s32.totalorder %s13, 9
      %p160 = pnand %p158, %p159
      %p161 = pneg %p160
      // Predicated region
      $region9: #{tpu_custom_call.1} parent=5 // pred_check
        _
      $region10: #{tpu_custom_call.1} parent=5 // pred_check_branch
        %163 = sbr.rel (%p160) target = $region12
      $region11: #{tpu_custom_call.1} parent=5 // pred_region
        %s164 = ssub.s32 %s13, 1
        // Predicated region
        $region13: #{tpu_custom_call.1} parent=11 // pred_check
          %p165 = pneg %p124
        $region14: #{tpu_custom_call.1} parent=11 // pred_check_branch
          %167 = sbr.rel (%p165) target = $region16
        $region15: #{tpu_custom_call.1} parent=11 // pred_region
          _
        $region16: #{tpu_custom_call.1} parent=11 // pred_fallthru
          _
      $region12: #{tpu_custom_call.1} parent=5 // pred_fallthru
        _
      %p168 = scmp.lt.s32.totalorder %s13, 8
      // Predicated region
      $region17: #{tpu_custom_call.1} parent=5 // pred_check
        %p169 = pneg %p168
      $region18: #{tpu_custom_call.1} parent=5 // pred_check_branch
        %171 = sbr.rel (%p169) target = $region20
      $region19: #{tpu_custom_call.1} parent=5 // pred_region
        // Predicated region
        $region21: #{tpu_custom_call.1} parent=19 // pred_check
          %p172 = pneg %p45
        $region22: #{tpu_custom_call.1} parent=19 // pred_check_branch
          %174 = sbr.rel (%p172) target = $region24
        $region23: #{tpu_custom_call.1} parent=19 // pred_region
          %p175 = scmp.lt.s32.totalorder %s20, 1
          %s176 = scalar_select %p175, %s20, 1
          %s177 = smul.addr %s176, 2
          %s178 = smul.addr %s177, 4
          %s179 = scalar_lea.vmem %s0, %s178
        $region24: #{tpu_custom_call.1} parent=19 // pred_fallthru
          _
        // Predicated region
        $region25: #{tpu_custom_call.1} parent=19 // pred_check
          %p180 = pneg %p71
        $region26: #{tpu_custom_call.1} parent=19 // pred_check_branch
          %182 = sbr.rel (%p180) target = $region28
        $region27: #{tpu_custom_call.1} parent=19 // pred_region
          %p183 = scmp.lt.s32.totalorder %s21, 3
          %s184 = scalar_select %p183, %s21, 3
          %s185 = smul.addr %s184, 4
          %s186 = smul.addr %s185, 4
          %s187 = scalar_lea.vmem %s1, %s186
        $region28: #{tpu_custom_call.1} parent=19 // pred_fallthru
          _
        // Predicated region
        $region29: #{tpu_custom_call.1} parent=19 // pred_check
          %p188 = pneg %p97
        $region30: #{tpu_custom_call.1} parent=19 // pred_check_branch
          %190 = sbr.rel (%p188) target = $region32
        $region31: #{tpu_custom_call.1} parent=19 // pred_region
          %p191 = scmp.lt.s32.totalorder %s21, 3
          %s192 = scalar_select %p191, %s21, 3
          %s193 = smul.addr %s192, 4
          %s194 = scalar_lea.vmem %s2, %s193
        $region32: #{tpu_custom_call.1} parent=19 // pred_fallthru
          _
      $region20: #{tpu_custom_call.1} parent=5 // pred_fallthru
        _
      %p195 = scmp.le.s32.totalorder 1, %s13
      %p196 = scmp.lt.s32.totalorder %s13, 9
      %p197 = pnand %p195, %p196
      %p198 = pneg %p197
      // Predicated region
      $region33: #{tpu_custom_call.1} parent=5 // pred_check
        _
      $region34: #{tpu_custom_call.1} parent=5 // pred_check_branch
        %200 = sbr.rel (%p197) target = $region36
      $region35: #{tpu_custom_call.1} parent=5 // pred_region
        %s201 = ssub.s32 %s13, 1
        %p202 = scmp.lt.s32.totalorder %s22, 1
        %s203 = scalar_select %p202, %s22, 1
        %s204 = smul.addr %s203, 2
        %s205 = smul.addr %s204, 4
        %s206 = scalar_lea.vmem %s0, %s205
        %p207 = pneg %p51
        %p208 = pneg %p48
        %p209 = scmp.lt.s32.totalorder %s23, 3
        %s210 = scalar_select %p209, %s23, 3
        %s211 = smul.addr %s210, 4
        %s212 = smul.addr %s211, 4
        %s213 = scalar_lea.vmem %s1, %s212
        %p214 = pneg %p77
        %p215 = pneg %p74
        %p216 = scmp.lt.s32.totalorder %s23, 3
        %s217 = scalar_select %p216, %s23, 3
        %s218 = smul.addr %s217, 4
        %s219 = scalar_lea.vmem %s2, %s218
        %p220 = pneg %p103
        %p221 = pneg %p100
        %p222 = pneg %p124
        %p223 = pneg %p121
        %p224 = pneg %p150
        %p225 = pneg %p147
        %s226 = sand.u32 %s137, 1
        %s227 = scalar_lea.sflag [#allocation4], %s226
        %s228 = sand.u32 %s137, 1
        %s229 = smul.addr %s228, 16
        %s230 = scalar_lea.vmem [#allocation3], %s229
        %p231 = scmp.lt.s32.totalorder %s22, 1
        %s232 = scalar_select %p231, %s22, 1
        %s233 = smul.addr %s232, 2
        %s234 = smul.addr %s233, 4
        %s235 = scalar_lea.vmem %s0, %s234
        %p236 = scmp.lt.s32.totalorder %s23, 3
        %s237 = scalar_select %p236, %s23, 3
        %s238 = smul.addr %s237, 4
        %s239 = smul.addr %s238, 4
        %s240 = scalar_lea.vmem %s1, %s239
        %p241 = scmp.lt.s32.totalorder %s23, 3
        %s242 = scalar_select %p241, %s23, 3
        %s243 = smul.addr %s242, 4
        %s244 = scalar_lea.vmem %s2, %s243
        %v246 = vld [vmem:[%s235] sm:$0xf]
        %v247 = vld [vmem:[%s235 + $0x4] sm:$0xf]
        %v248 = vld [vmem:[%s240] sm:$0xf]
        %v249 = vld [vmem:[%s240 + $0x4] sm:$0xf]
        %v250 = vld [vmem:[%s240 + $0x8] sm:$0xf]
        %v251 = vld [vmem:[%s240 + $0xc] sm:$0xf]
        %v254 = vunpack.c.l.b16 %v246
        %v255 = vunpack.c.l.b16 %v247
        %v256 = vpack.c.b16 %v255, %v254
        %v261 = vunpack.c.l.b16 %v248
        %v262 = vunpack.c.l.b16 %v249
        %v263 = vunpack.c.l.b16 %v250
        %v264 = vunpack.c.l.b16 %v251
        %v265 = vpack.c.b16 %v262, %v261
        %v266 = vpack.c.b16 %v264, %v263
        %vm269 = vcmask 261120
        %v271 = vsel %vm269, %v256, 0
        %273 = vmatprep.subr.bf16.mxu0 0
        %274 = vmatpush1.bf16.msra.mxu0 %v265
        %275 = vmatprep.subr.bf16.mxu0 0
        %276 = vmatpush1.bf16.msra.mxu0 %v266
        %277 = vmatprep.subr.bf16.mxu0 0
        %278 = vmatpush1.bf16.msra.mxu0 0
        %279 = vmatprep.subr.bf16.mxu0 0
        %280 = vmatpush1.bf16.msra.mxu0 0
        %281 = vmatprep.subr.bf16.mxu0 0
        %282 = vmatpush1.bf16.msra.mxu0 0
        %283 = vmatprep.subr.bf16.mxu0 0
        %284 = vmatpush1.bf16.msra.mxu0 0
        %285 = vmatprep.subr.bf16.mxu0 0
        %286 = vmatpush1.bf16.msra.mxu0 0
        %287 = vmatprep.subr.bf16.mxu0 0
        %288 = vmatpush1.bf16.msra.mxu0 0
        %289 = vmatprep.subr.bf16.mxu0 0
        %290 = vmatpush1.bf16.msra.mxu0 0
        %291 = vmatprep.subr.bf16.mxu0 0
        %292 = vmatpush1.bf16.msra.mxu0 0
        %293 = vmatprep.subr.bf16.mxu0 0
        %294 = vmatpush1.bf16.msra.mxu0 0
        %295 = vmatprep.subr.bf16.mxu0 0
        %296 = vmatpush1.bf16.msra.mxu0 0
        %297 = vmatprep.subr.bf16.mxu0 0
        %298 = vmatpush1.bf16.msra.mxu0 0
        %299 = vmatprep.subr.bf16.mxu0 0
        %300 = vmatpush1.bf16.msra.mxu0 0
        %301 = vmatprep.subr.bf16.mxu0 0
        %302 = vmatpush1.bf16.msra.mxu0 0
        %303 = vmatprep.subr.bf16.mxu0 0
        %304 = vmatpush1.bf16.msra.mxu0 0
        %305 = vmatprep.mubr.bf16.mxu0 0
        %306 = vmatmul.mubr.bf16.gmra.mrb[0].mxu0 %v271
        %v307 = vpop.f32.mrb[0].mxu0
        %v308 = vadd.f32 0.0, %v307
        %v309 = vpop.f32.mrb[0].mxu0
        %v310 = vpop.f32.mrb[0].mxu0
        %v311 = vadd.f32 0.0, %v310
        %v312 = vpop.f32.mrb[0].mxu0
        %313 = vdwg.mxu0
        %v314 = vpack.c.bf16 %v311, %v308
        %316 = vrot.lane.b32.xlu0 %v314, 120
        %v317 = vpop.permute.xlu0 %316
        %vm318 = vcmask 64512
        %v320 = vsel %vm318, %v314, 0
        %v323 = vsel %vm318, %v317, 0
        %325 = vmatprep.subr.bf16.mxu0 0
        %326 = vmatpush1.bf16.xpose.msra.mxu0 %v323
        %327 = vmatprep.subr.bf16.mxu0 0
        %328 = vmatpush1.bf16.xpose.msra.mxu0 0
        %329 = vmatprep.subr.bf16.mxu0 0
        %330 = vmatpush1.bf16.xpose.msra.mxu0 0
        %331 = vmatprep.subr.bf16.mxu0 0
        %332 = vmatpush1.bf16.xpose.msra.mxu0 0
        %333 = vmatprep.subr.bf16.mxu0 0
        %334 = vmatpush1.bf16.xpose.msra.mxu0 0
        %335 = vmatprep.subr.bf16.mxu0 0
        %336 = vmatpush1.bf16.xpose.msra.mxu0 0
        %337 = vmatprep.subr.bf16.mxu0 0
        %338 = vmatpush1.bf16.xpose.msra.mxu0 0
        %339 = vmatprep.subr.bf16.mxu0 0
        %340 = vmatpush1.bf16.xpose.msra.mxu0 0
        %341 = vmatprep.subr.bf16.mxu0 0
        %342 = vmatpush1.bf16.xpose.msra.mxu0 0
        %343 = vmatprep.subr.bf16.mxu0 0
        %344 = vmatpush1.bf16.xpose.msra.mxu0 0
        %345 = vmatprep.subr.bf16.mxu0 0
        %346 = vmatpush1.bf16.xpose.msra.mxu0 0
        %347 = vmatprep.subr.bf16.mxu0 0
        %348 = vmatpush1.bf16.xpose.msra.mxu0 0
        %349 = vmatprep.subr.bf16.mxu0 0
        %350 = vmatpush1.bf16.xpose.msra.mxu0 0
        %351 = vmatprep.subr.bf16.mxu0 0
        %352 = vmatpush1.bf16.xpose.msra.mxu0 0
        %353 = vmatprep.subr.bf16.mxu0 0
        %354 = vmatpush1.bf16.xpose.msra.mxu0 0
        %355 = vmatprep.subr.bf16.mxu0 0
        %356 = vmatpush1.bf16.xpose.msra.mxu0 0
        %357 = vmatprep.mubr.bf16.mxu0 0
        %358 = vmatmul.mubr.bf16.gmra.mrb[0].mxu0 %v320
        %v359 = vpop.f32.mrb[0].mxu0
        %v360 = vadd.f32 0.0, %v359
        %v361 = vpop.f32.mrb[0].mxu0
        %v362 = vpop.f32.mrb[0].mxu0
        %v363 = vadd.f32 0.0, %v362
        %v364 = vpop.f32.mrb[0].mxu0
        %365 = vdwg.mxu0
        %vm366 = vcmask 130048
        %v367 = vsel %vm366, %v360, -inf
        %368 = vmax.xlane.f32.xlu0 %v367
        %v369 = vpop.xlane.xlu0 %368
        %v370 = vsel %vm366, %v363, -inf
        %371 = vmax.xlane.f32.xlu0 %v370
        %v372 = vpop.xlane.xlu0 %371
        %v373 = vsub.f32 %v360, %v369
        %v374 = vsub.f32 %v363, %v372
        %v375 = vmul.f32 %v373, 1.442695
        %v376 = vpow.pop %v375
        %v377 = vmul.f32 %v374, 1.442695
        %v378 = vpow.pop %v377
        %v379 = vsel %vm366, %v376, 0.0
        %380 = vadd.xlane.f32.xlu0 %v379
        %v381 = vpop.xlane.xlu0 %380
        %v382 = vsel %vm366, %v378, 0.0
        %383 = vadd.xlane.f32.xlu0 %v382
        %v384 = vpop.xlane.xlu0 %383
        %v385 = vpack.c.bf16 %v378, %v376
        %386 = vrot.lane.b32.xlu0 %v314, 112
        %v387 = vpop.permute.xlu0 %386
        %v390 = vsel %vm366, %v385, 0
        %392 = vmatprep.subr.bf16.mxu0 0
        %393 = vmatpush1.bf16.msra.mxu0 %v387
        %394 = vmatprep.subr.bf16.mxu0 0
        %395 = vmatpush1.bf16.msra.mxu0 0
        %396 = vmatprep.subr.bf16.mxu0 0
        %397 = vmatpush1.bf16.msra.mxu0 0
        %398 = vmatprep.subr.bf16.mxu0 0
        %399 = vmatpush1.bf16.msra.mxu0 0
        %400 = vmatprep.subr.bf16.mxu0 0
        %401 = vmatpush1.bf16.msra.mxu0 0
        %402 = vmatprep.subr.bf16.mxu0 0
        %403 = vmatpush1.bf16.msra.mxu0 0
        %404 = vmatprep.subr.bf16.mxu0 0
        %405 = vmatpush1.bf16.msra.mxu0 0
        %406 = vmatprep.subr.bf16.mxu0 0
        %407 = vmatpush1.bf16.msra.mxu0 0
        %408 = vmatprep.subr.bf16.mxu0 0
        %409 = vmatpush1.bf16.msra.mxu0 0
        %410 = vmatprep.subr.bf16.mxu0 0
        %411 = vmatpush1.bf16.msra.mxu0 0
        %412 = vmatprep.subr.bf16.mxu0 0
        %413 = vmatpush1.bf16.msra.mxu0 0
        %414 = vmatprep.subr.bf16.mxu0 0
        %415 = vmatpush1.bf16.msra.mxu0 0
        %416 = vmatprep.subr.bf16.mxu0 0
        %417 = vmatpush1.bf16.msra.mxu0 0
        %418 = vmatprep.subr.bf16.mxu0 0
        %419 = vmatpush1.bf16.msra.mxu0 0
        %420 = vmatprep.subr.bf16.mxu0 0
        %421 = vmatpush1.bf16.msra.mxu0 0
        %422 = vmatprep.subr.bf16.mxu0 0
        %423 = vmatpush1.bf16.msra.mxu0 0
        %424 = vmatprep.mubr.bf16.mxu0 0
        %425 = vmatmul.mubr.bf16.gmra.mrb[0].mxu0 %v390
        %v426 = vpop.f32.mrb[0].mxu0
        %v427 = vadd.f32 0.0, %v426
        %v428 = vpop.f32.mrb[0].mxu0
        %v429 = vpop.f32.mrb[0].mxu0
        %v430 = vadd.f32 0.0, %v429
        %v431 = vpop.f32.mrb[0].mxu0
        %432 = vdwg.mxu0
        %v433 = vrcp.pop %v381
        %v434 = vrcp.pop %v384
        %v435 = vmul.f32 %v427, %v433
        %v436 = vmul.f32 %v430, %v434
        %v437 = vpack.c.bf16 %v436, %v435
        %v438 = vld [vmem:[%s244] sm:$0xf]
        %v440 = vsel %vm318, %v437, 0
        %vm442 = vcmask 1043456
        %v444 = vsel %vm442, %v438, 0
        %446 = vmatprep.subr.bf16.mxu0 0
        %447 = vmatpush1.bf16.msra.mxu0 %v444
        %448 = vmatprep.subr.bf16.mxu0 0
        %449 = vmatpush1.bf16.msra.mxu0 0
        %450 = vmatprep.subr.bf16.mxu0 0
        %451 = vmatpush1.bf16.msra.mxu0 0
        %452 = vmatprep.subr.bf16.mxu0 0
        %453 = vmatpush1.bf16.msra.mxu0 0
        %454 = vmatprep.subr.bf16.mxu0 0
        %455 = vmatpush1.bf16.msra.mxu0 0
        %456 = vmatprep.subr.bf16.mxu0 0
        %457 = vmatpush1.bf16.msra.mxu0 0
        %458 = vmatprep.subr.bf16.mxu0 0
        %459 = vmatpush1.bf16.msra.mxu0 0
        %460 = vmatprep.subr.bf16.mxu0 0
        %461 = vmatpush1.bf16.msra.mxu0 0
        %462 = vmatprep.subr.bf16.mxu0 0
        %463 = vmatpush1.bf16.msra.mxu0 0
        %464 = vmatprep.subr.bf16.mxu0 0
        %465 = vmatpush1.bf16.msra.mxu0 0
        %466 = vmatprep.subr.bf16.mxu0 0
        %467 = vmatpush1.bf16.msra.mxu0 0
        %468 = vmatprep.subr.bf16.mxu0 0
        %469 = vmatpush1.bf16.msra.mxu0 0
        %470 = vmatprep.subr.bf16.mxu0 0
        %471 = vmatpush1.bf16.msra.mxu0 0
        %472 = vmatprep.subr.bf16.mxu0 0
        %473 = vmatpush1.bf16.msra.mxu0 0
        %474 = vmatprep.subr.bf16.mxu0 0
        %475 = vmatpush1.bf16.msra.mxu0 0
        %476 = vmatprep.subr.bf16.mxu0 0
        %477 = vmatpush1.bf16.msra.mxu0 0
        %478 = vmatprep.mubr.bf16.mxu0 0
        %479 = vmatmul.mubr.bf16.gmra.mrb[0].mxu0 %v440
        %v480 = vpop.f32.mrb[0].mxu0
        %v481 = vadd.f32 0.0, %v480
        %v482 = vpop.f32.mrb[0].mxu0
        %v483 = vpop.f32.mrb[0].mxu0
        %v484 = vadd.f32 0.0, %v483
        %v485 = vpop.f32.mrb[0].mxu0
        %486 = vdwg.mxu0
        %p487 = scmp.eq.s32.totalorder %s23, 0
        // Predicated region
        $region37: #{tpu_custom_call.1} parent=35 // pred_check
          %p488 = pneg %p487
        $region38: #{tpu_custom_call.1} parent=35 // pred_check_branch
          %490 = sbr.rel (%p488) target = $region40
        $region39: #{tpu_custom_call.1} parent=35 // pred_region
          %491 = vst.msk [vmem:[#allocation2] sm:$0xff] %vm269, 0.0
          %492 = vst.msk [vmem:[#allocation2 + $0x8] sm:$0xff] %vm269, 0.0
        $region40: #{tpu_custom_call.1} parent=35 // pred_fallthru
          _
        %v493 = vld [vmem:[#allocation2] sm:$0xff]
        %v494 = vld [vmem:[#allocation2 + $0x8] sm:$0xff]
        %v495 = vadd.f32 %v493, %v481
        %v496 = vadd.f32 %v494, %v484
        %497 = vst.msk [vmem:[#allocation2] sm:$0xff] %vm269, %v495
        %498 = vst.msk [vmem:[#allocation2 + $0x8] sm:$0xff] %vm269, %v496
        %p499 = scmp.eq.s32.totalorder %s23, 3
        // Predicated region
        $region41: #{tpu_custom_call.1} parent=35 // pred_check
          %p500 = pneg %p499
        $region42: #{tpu_custom_call.1} parent=35 // pred_check_branch
          %502 = sbr.rel (%p500) target = $region44
        $region43: #{tpu_custom_call.1} parent=35 // pred_region
          %v503 = vld [vmem:[#allocation2] sm:$0xff]
          %v504 = vld [vmem:[#allocation2 + $0x8] sm:$0xff]
          %v505 = vld [vmem:[%s3] sm:$0x1]
          %v507 = vlaneseq
          %v508 = vshrl.u32 %v507, 7
          %v509 = vsub.s32 0, %v508
          %v510 = vrot.slane %v505, %v509
          %v512 = vadd.f32 %v503, %v510
          %v513 = vadd.f32 %v504, %v510
          %514 = vst.msk [vmem:[%s230] sm:$0xff] %vm269, %v512
          %515 = vst.msk [vmem:[%s230 + $0x8] sm:$0xff] %vm269, %v513
        $region44: #{tpu_custom_call.1} parent=35 // pred_fallthru
          _
        %s516 = sand.u32 %s137, 1
        %s517 = scalar_lea.sflag [#allocation4], %s516
        %s518 = sand.u32 %s137, 1
        %s519 = smul.addr %s518, 16
        %s520 = scalar_lea.vmem [#allocation3], %s519
        // Predicated region
        $region45: #{tpu_custom_call.1} parent=35 // pred_check
          %p521 = pneg %p147
        $region46: #{tpu_custom_call.1} parent=35 // pred_check_branch
          %523 = sbr.rel (%p521) target = $region48
        $region47: #{tpu_custom_call.1} parent=35 // pred_region
          %s525 = ssub.s32 256, 256
          %526 = vsyncadd %s517, %s525
          %s527 = smul.addr %s22, 2
          %s528 = smul.addr %s527, 128
          %s529 = scalar_lea.hbm %s4, %s528
          %s530 = sshll.u32 %s520, 4
          %s531 = int_to_ptr.vmem [resolvable:$true] %s530
          %536 = dma.vmem_to_hbm [thread:$0]  %s531, 256, %s529, %s517, 128, 128, 8
        $region48: #{tpu_custom_call.1} parent=35 // pred_fallthru
          _
      $region36: #{tpu_custom_call.1} parent=5 // pred_fallthru
        _
      %p537 = scmp.le.s32.totalorder 2, %s13
      // Predicated region
      $region49: #{tpu_custom_call.1} parent=5 // pred_check
        %p538 = pneg %p537
      $region50: #{tpu_custom_call.1} parent=5 // pred_check_branch
        %540 = sbr.rel (%p538) target = $region52
      $region51: #{tpu_custom_call.1} parent=5 // pred_region
        %s541 = ssub.s32 %s13, 2
        // Predicated region
        $region53: #{tpu_custom_call.1} parent=51 // pred_check
          %p542 = pneg %p153
        $region54: #{tpu_custom_call.1} parent=51 // pred_check_branch
          %544 = sbr.rel (%p542) target = $region56
        $region55: #{tpu_custom_call.1} parent=51 // pred_region
          %s545 = sand.u32 %s138, 1
          %s546 = scalar_lea.sflag [#allocation4], %s545
          %s547 = sand.u32 %s138, 1
          %s548 = smul.addr %s547, 16
          %s549 = scalar_lea.vmem [#allocation3], %s548
          %550 = dma.done %s546, 256
        $region56: #{tpu_custom_call.1} parent=51 // pred_fallthru
          _
      $region52: #{tpu_custom_call.1} parent=5 // pred_fallthru
        _
    $region6: #{tpu_custom_call.1} parent=1 // loop_footer
      %s17 = sadd.s32 1, %s13
    $region7: #{tpu_custom_call.1} parent=1 // loop_footer_branch
      %12 = sbr.rel target = $region3
    $region8: #{tpu_custom_call.1} parent=1 // loop_exit
      _
    %551 = vsyncpa [#allocation4], 1
    %s552 = scalar_lea.sflag [#allocation4], 1
    %553 = vsyncpa %s552, 1

</llo_original>
